<compile_context>
chip_gen: v7x
topology: tpu7x:2x2x1
jax: 0.10.0
libtpu: 0.0.40
codegen_flags: <defaults>
</compile_context>

<pallas_src>
import jax
import jax.numpy as jnp
from jax.experimental import pallas as pl
from jax.experimental.pallas import tpu as pltpu

_COMPUTE_DTYPE = jnp.bfloat16   # MXU operand dtype; accumulation stays f32.
_ROW_PACK = 16                  # bf16 sublane packing: 16 rows per vreg.
_VMEM_TARGET_BYTES = 40 * 1024 * 1024  # well under v7x's 64 MiB physical VMEM.


def _round_up(x, m):
    return (x + m - 1) // m * m


def _has_256_mxu():
    """True on chips with 256x256 MXUs (v6e / v7x); False on v5e and older."""
    try:
        kind = jax.devices()[0].device_kind.lower()
    except Exception:
        return False
    return not any(tag in kind for tag in ("v2", "v3", "v4", "v5"))


def qnet_kernel(x_ref,
                w1_ref, b1_ref,
                w2_ref, b2_ref,
                w3_ref, b3_ref,
                wf_ref, bf_ref,
                alpha_ref,   # SMEM, shape (3,), f32
                out_ref):
    cdt = _COMPUTE_DTYPE

    # Hoist SMEM scalar reads out of the vector stream.
    a0 = alpha_ref[0]
    a1 = alpha_ref[1]
    a2 = alpha_ref[2]

    # x arrives as f32; cast to bf16 on the VPU (rides in spare VALU slots).
    x = x_ref[...].astype(cdt)

    # layer1: Linear (bf16 MXU, f32 acc) + bias/PReLU in f32
    h = jnp.dot(x, w1_ref[...], preferred_element_type=jnp.float32) + b1_ref[...]
    h = jnp.where(h > 0, h, a0 * h)

    # layer2
    h = jnp.dot(h.astype(cdt), w2_ref[...],
                preferred_element_type=jnp.float32) + b2_ref[...]
    h = jnp.where(h > 0, h, a1 * h)

    # layer3
    h = jnp.dot(h.astype(cdt), w3_ref[...],
                preferred_element_type=jnp.float32) + b3_ref[...]
    h = jnp.where(h > 0, h, a2 * h)

    # final: Linear, lane-dense store
    out_ref[...] = (jnp.dot(h.astype(cdt), wf_ref[...],
                            preferred_element_type=jnp.float32)
                    + bf_ref[...]).astype(out_ref.dtype)


def qnetwork_forward(x, params, *, tile_n=1024, out_dtype=jnp.float32):
    """x: (n, input_dim) f32. params: dict with (in, out)-layout weights.

    Returns (n, output_dim) f32 Q-values.
    """
    n, input_dim = x.shape
    hidden_dim = params["w1"].shape[1]
    output_dim = params["wf"].shape[1]

    # --- Feature padding: full MXU tiles (256 on v6e/v7x when the real dim is
    # large enough to benefit, otherwise 128). Lane-dense output either way.
    big_mxu = _has_256_mxu()

    def pad_dim(d):
        mult = 256 if (big_mxu and d >= 256) else 128
        return _round_up(d, mult)

    in_p = pad_dim(input_dim)
    h_p = pad_dim(hidden_dim)
    out_p = pad_dim(output_dim)

    out_isz = jnp.dtype(out_dtype).itemsize

    # --- Resident (single-buffered) weight/bias VMEM bytes.
    weight_bytes = ((in_p * h_p + 2 * h_p * h_p + h_p * out_p) * 2
                    + (3 * h_p + out_p) * 4)

    # --- Batch tile selection: multiple of 16 rows, as large as fits the VMEM
    # budget; single grid step for small batches, >=2 steps for large ones so
    # both v7x TensorCores get work.
    n_16 = _round_up(n, _ROW_PACK)
    tile = min(_round_up(max(tile_n, _ROW_PACK), _ROW_PACK), n_16)
    if n_16 >= 4096 and tile >= n_16:
        tile = _round_up((n_16 + 1) // 2, _ROW_PACK)   # at least 2 grid steps

    def step_bytes(t):
        x_io = 2 * t * in_p * 4            # double-buffered f32 x tile
        o_io = 2 * t * out_p * out_isz     # double-buffered output tile
        act = 3 * t * h_p * 4              # f32/bf16 activation temps (generous)
        return x_io + o_io + act

    while tile > _ROW_PACK and weight_bytes + step_bytes(tile) > _VMEM_TARGET_BYTES:
        tile = _round_up(tile // 2, _ROW_PACK)

    n_pad = _round_up(n_16, tile)
    grid = (n_pad // tile,)

    vmem_limit = int(1.2 * (weight_bytes + step_bytes(tile)))
    vmem_limit = max(vmem_limit, 4 * 1024 * 1024)
    vmem_limit = min(vmem_limit, 60 * 1024 * 1024)   # stay under v7x physical VMEM

    # --- Padding (exact: zero weights/bias, PReLU(0)=0). x stays f32.
    def pad2(a, rows, cols, dtype):
        a = a.astype(dtype)
        pr, pc = rows - a.shape[0], cols - a.shape[1]
        if pr or pc:
            a = jnp.pad(a, ((0, pr), (0, pc)))
        return a

    xp = pad2(x, n_pad, in_p, jnp.float32)
    w1 = pad2(params["w1"], in_p, h_p, _COMPUTE_DTYPE)
    w2 = pad2(params["w2"], h_p, h_p, _COMPUTE_DTYPE)
    w3 = pad2(params["w3"], h_p, h_p, _COMPUTE_DTYPE)
    wf = pad2(params["wf"], h_p, out_p, _COMPUTE_DTYPE)
    b1 = pad2(params["b1"], 1, h_p, jnp.float32)
    b2 = pad2(params["b2"], 1, h_p, jnp.float32)
    b3 = pad2(params["b3"], 1, h_p, jnp.float32)
    bf = pad2(params["bf"], 1, out_p, jnp.float32)
    alpha = params["alpha"].astype(jnp.float32)

    # Weights/biases: constant index_map + single buffer -> resident in VMEM.
    def const_spec(shape):
        return pl.BlockSpec(shape, lambda i: (0, 0), pipeline_mode=pl.Buffered(1))

    x_spec = pl.BlockSpec((tile, in_p), lambda i: (i, 0))
    out_spec = pl.BlockSpec((tile, out_p), lambda i: (i, 0))

    flops = 2 * n_pad * (in_p * h_p + 2 * h_p * h_p + h_p * out_p)
    bytes_accessed = (xp.size * 4
                      + (w1.size + w2.size + w3.size + wf.size) * 2
                      + (b1.size + b2.size + b3.size + bf.size) * 4
                      + n_pad * out_p * out_isz)

    out = pl.pallas_call(
        qnet_kernel,
        out_shape=jax.ShapeDtypeStruct((n_pad, out_p), out_dtype),
        grid=grid,
        in_specs=[x_spec,
                  const_spec((in_p, h_p)), const_spec((1, h_p)),
                  const_spec((h_p, h_p)), const_spec((1, h_p)),
                  const_spec((h_p, h_p)), const_spec((1, h_p)),
                  const_spec((h_p, out_p)), const_spec((1, out_p)),
                  pl.BlockSpec(memory_space=pltpu.MemorySpace.SMEM)],
        out_specs=out_spec,
        compiler_params=pltpu.CompilerParams(
            dimension_semantics=("parallel",),
            vmem_limit_bytes=vmem_limit),
        cost_estimate=pl.CostEstimate(flops=flops, transcendentals=0,
                                      bytes_accessed=bytes_accessed),
    )(xp, w1, b1, w2, b2, w3, b3, wf, bf, alpha)

    return out[:n, :output_dim].astype(jnp.float32)


def init_params(key, input_dim, output_dim, hidden_dim):
    ks = jax.random.split(key, 8)
    scale = 0.1
    # Weights stored as (in, out) so the kernel does x @ W directly.
    return {
        "w1": scale * jax.random.normal(ks[0], (input_dim, hidden_dim), jnp.float32),
        "b1": scale * jax.random.normal(ks[1], (1, hidden_dim), jnp.float32),
        "w2": scale * jax.random.normal(ks[2], (hidden_dim, hidden_dim), jnp.float32),
        "b2": scale * jax.random.normal(ks[3], (1, hidden_dim), jnp.float32),
        "w3": scale * jax.random.normal(ks[4], (hidden_dim, hidden_dim), jnp.float32),
        "b3": scale * jax.random.normal(ks[5], (1, hidden_dim), jnp.float32),
        "wf": scale * jax.random.normal(ks[6], (hidden_dim, output_dim), jnp.float32),
        "bf": scale * jax.random.normal(ks[7], (1, output_dim), jnp.float32),
        # torch.nn.PReLU() default: single scalar parameter per layer, init 0.25
        "alpha": jnp.full((3,), 0.25, dtype=jnp.float32),
    }


def reference_forward(x, p, compute_dtype=jnp.float32):
    """Pure-JAX reference. compute_dtype=bfloat16 matches the kernel's MXU precision."""
    cdt = compute_dtype

    def lin(h, w, b):
        return jnp.dot(h.astype(cdt), w.astype(cdt),
                       preferred_element_type=jnp.float32) + b

    def prelu(h, a):
        return jnp.where(h > 0, h, a * h)

    h = prelu(lin(x, p["w1"], p["b1"]), p["alpha"][0])
    h = prelu(lin(h, p["w2"], p["b2"]), p["alpha"][1])
    h = prelu(lin(h, p["w3"], p["b3"]), p["alpha"][2])
    return lin(h, p["wf"], p["bf"])


if __name__ == "__main__":
    key = jax.random.PRNGKey(0)
    k_param, k_x = jax.random.split(key)

    # Small test sizes consistent with the module: (n, input_dim) -> (n, output_dim).
    n, input_dim, output_dim, hidden_dim = 20, 16, 4, 32
    params = init_params(k_param, input_dim, output_dim, hidden_dim)
    x = jax.random.normal(k_x, (n, input_dim), jnp.float32)

    # Default path: single grid step covering the whole (row-padded) batch.
    out = qnetwork_forward(x, params)
    out = jax.block_until_ready(out)
    assert out.shape == (n, output_dim)

    # Multi-step pipelined path: tile of 16 rows (full bf16 sublane pack) -> grid=2.
    out_tiled = qnetwork_forward(x, params, tile_n=16)
    out_tiled = jax.block_until_ready(out_tiled)
    assert out_tiled.shape == (n, output_dim)

    # Match kernel precision (bf16 MXU operands, f32 accumulation).
    ref_bf16 = reference_forward(x, params, compute_dtype=jnp.bfloat16)
    assert jnp.allclose(out, ref_bf16, atol=1e-2, rtol=1e-2), "mismatch vs bf16 reference"
    assert jnp.allclose(out_tiled, ref_bf16, atol=1e-2, rtol=1e-2), "tiled mismatch vs bf16 reference"

    # Sanity check against full-f32 math with bf16-appropriate tolerance.
    ref_f32 = reference_forward(x, params, compute_dtype=jnp.float32)
    assert jnp.allclose(out, ref_f32, atol=5e-2, rtol=5e-2), "mismatch vs f32 reference"

    print("KERNEL_OK")
</pallas_src>

<mosaic_0001>
module attributes {stable_mosaic.version = 11 : i64} {
  func.func @qnet_kernel(%arg0: i32, %arg1: memref<32x128xf32, #tpu.memory_space<vmem>>, %arg2: memref<128x128xbf16, #tpu.memory_space<vmem>>, %arg3: memref<1x128xf32, #tpu.memory_space<vmem>>, %arg4: memref<128x128xbf16, #tpu.memory_space<vmem>>, %arg5: memref<1x128xf32, #tpu.memory_space<vmem>>, %arg6: memref<128x128xbf16, #tpu.memory_space<vmem>>, %arg7: memref<1x128xf32, #tpu.memory_space<vmem>>, %arg8: memref<128x128xbf16, #tpu.memory_space<vmem>>, %arg9: memref<1x128xf32, #tpu.memory_space<vmem>>, %arg10: memref<3xf32, #tpu.memory_space<smem>>, %arg11: memref<32x128xf32, #tpu.memory_space<vmem>>) attributes {dimension_semantics = [#tpu.dimension_semantics<parallel>], iteration_bounds = array<i64: 1>, scalar_prefetch = 0 : i64, scratch_operands = 0 : i64, tpu.core_type = #tpu.core_type<tc>, window_params = [{transform_indices = @transform_0, window_bounds = array<i64: 32, 128>}, {pipeline_mode = #tpu.pipeline_mode<synchronous>, transform_indices = @transform_1, window_bounds = array<i64: 128, 128>}, {pipeline_mode = #tpu.pipeline_mode<synchronous>, transform_indices = @transform_2, window_bounds = array<i64: 1, 128>}, {pipeline_mode = #tpu.pipeline_mode<synchronous>, transform_indices = @transform_3, window_bounds = array<i64: 128, 128>}, {pipeline_mode = #tpu.pipeline_mode<synchronous>, transform_indices = @transform_4, window_bounds = array<i64: 1, 128>}, {pipeline_mode = #tpu.pipeline_mode<synchronous>, transform_indices = @transform_5, window_bounds = array<i64: 128, 128>}, {pipeline_mode = #tpu.pipeline_mode<synchronous>, transform_indices = @transform_6, window_bounds = array<i64: 1, 128>}, {pipeline_mode = #tpu.pipeline_mode<synchronous>, transform_indices = @transform_7, window_bounds = array<i64: 128, 128>}, {pipeline_mode = #tpu.pipeline_mode<synchronous>, transform_indices = @transform_8, window_bounds = array<i64: 1, 128>}, {transform_indices = @transform_9, window_bounds = array<i64: 3>}, {transform_indices = @transform_10, window_bounds = array<i64: 32, 128>}]} {
    %c0 = arith.constant 0 : index
    %0 = memref.load %arg10[%c0] : memref<3xf32, #tpu.memory_space<smem>>
    %c1 = arith.constant 1 : index
    %1 = memref.load %arg10[%c1] : memref<3xf32, #tpu.memory_space<smem>>
    %c2 = arith.constant 2 : index
    %2 = memref.load %arg10[%c2] : memref<3xf32, #tpu.memory_space<smem>>
    %c0_0 = arith.constant 0 : index
    %c0_1 = arith.constant 0 : index
    %3 = vector.load %arg1[%c0_0, %c0_1] : memref<32x128xf32, #tpu.memory_space<vmem>>, vector<32x128xf32>
    %4 = arith.truncf %3 : vector<32x128xf32> to vector<32x128xbf16>
    %c0_2 = arith.constant 0 : index
    %c0_3 = arith.constant 0 : index
    %5 = vector.load %arg2[%c0_2, %c0_3] : memref<128x128xbf16, #tpu.memory_space<vmem>>, vector<128x128xbf16>
    %cst = arith.constant dense<0.000000e+00> : vector<32x128xf32>
    %6 = tpu.matmul %4, %5, %cst {dimension_numbers = #tpu.dot_dimension_numbers<[1], [0], [0], [1], [0, 0, 1, 1], [], []>} : vector<32x128xbf16>, vector<128x128xbf16>, vector<32x128xf32> -> vector<32x128xf32>
    %c0_4 = arith.constant 0 : index
    %c0_5 = arith.constant 0 : index
    %7 = vector.load %arg3[%c0_4, %c0_5] : memref<1x128xf32, #tpu.memory_space<vmem>>, vector<1x128xf32>
    %8 = vector.broadcast %7 : vector<1x128xf32> to vector<32x128xf32>
    %9 = arith.addf %6, %8 : vector<32x128xf32>
    %cst_6 = arith.constant 0.000000e+00 : f32
    %10 = vector.broadcast %cst_6 : f32 to vector<32x128xf32>
    %11 = arith.cmpf ogt, %9, %10 : vector<32x128xf32>
    %12 = vector.broadcast %0 : f32 to vector<32x128xf32>
    %13 = arith.mulf %12, %9 : vector<32x128xf32>
    %14 = arith.select %11, %9, %13 : vector<32x128xi1>, vector<32x128xf32>
    %15 = arith.truncf %14 : vector<32x128xf32> to vector<32x128xbf16>
    %c0_7 = arith.constant 0 : index
    %c0_8 = arith.constant 0 : index
    %16 = vector.load %arg4[%c0_7, %c0_8] : memref<128x128xbf16, #tpu.memory_space<vmem>>, vector<128x128xbf16>
    %cst_9 = arith.constant dense<0.000000e+00> : vector<32x128xf32>
    %17 = tpu.matmul %15, %16, %cst_9 {dimension_numbers = #tpu.dot_dimension_numbers<[1], [0], [0], [1], [0, 0, 1, 1], [], []>} : vector<32x128xbf16>, vector<128x128xbf16>, vector<32x128xf32> -> vector<32x128xf32>
    %c0_10 = arith.constant 0 : index
    %c0_11 = arith.constant 0 : index
    %18 = vector.load %arg5[%c0_10, %c0_11] : memref<1x128xf32, #tpu.memory_space<vmem>>, vector<1x128xf32>
    %19 = vector.broadcast %18 : vector<1x128xf32> to vector<32x128xf32>
    %20 = arith.addf %17, %19 : vector<32x128xf32>
    %cst_12 = arith.constant 0.000000e+00 : f32
    %21 = vector.broadcast %cst_12 : f32 to vector<32x128xf32>
    %22 = arith.cmpf ogt, %20, %21 : vector<32x128xf32>
    %23 = vector.broadcast %1 : f32 to vector<32x128xf32>
    %24 = arith.mulf %23, %20 : vector<32x128xf32>
    %25 = arith.select %22, %20, %24 : vector<32x128xi1>, vector<32x128xf32>
    %26 = arith.truncf %25 : vector<32x128xf32> to vector<32x128xbf16>
    %c0_13 = arith.constant 0 : index
    %c0_14 = arith.constant 0 : index
    %27 = vector.load %arg6[%c0_13, %c0_14] : memref<128x128xbf16, #tpu.memory_space<vmem>>, vector<128x128xbf16>
    %cst_15 = arith.constant dense<0.000000e+00> : vector<32x128xf32>
    %28 = tpu.matmul %26, %27, %cst_15 {dimension_numbers = #tpu.dot_dimension_numbers<[1], [0], [0], [1], [0, 0, 1, 1], [], []>} : vector<32x128xbf16>, vector<128x128xbf16>, vector<32x128xf32> -> vector<32x128xf32>
    %c0_16 = arith.constant 0 : index
    %c0_17 = arith.constant 0 : index
    %29 = vector.load %arg7[%c0_16, %c0_17] : memref<1x128xf32, #tpu.memory_space<vmem>>, vector<1x128xf32>
    %30 = vector.broadcast %29 : vector<1x128xf32> to vector<32x128xf32>
    %31 = arith.addf %28, %30 : vector<32x128xf32>
    %cst_18 = arith.constant 0.000000e+00 : f32
    %32 = vector.broadcast %cst_18 : f32 to vector<32x128xf32>
    %33 = arith.cmpf ogt, %31, %32 : vector<32x128xf32>
    %34 = vector.broadcast %2 : f32 to vector<32x128xf32>
    %35 = arith.mulf %34, %31 : vector<32x128xf32>
    %36 = arith.select %33, %31, %35 : vector<32x128xi1>, vector<32x128xf32>
    %37 = arith.truncf %36 : vector<32x128xf32> to vector<32x128xbf16>
    %c0_19 = arith.constant 0 : index
    %c0_20 = arith.constant 0 : index
    %38 = vector.load %arg8[%c0_19, %c0_20] : memref<128x128xbf16, #tpu.memory_space<vmem>>, vector<128x128xbf16>
    %cst_21 = arith.constant dense<0.000000e+00> : vector<32x128xf32>
    %39 = tpu.matmul %37, %38, %cst_21 {dimension_numbers = #tpu.dot_dimension_numbers<[1], [0], [0], [1], [0, 0, 1, 1], [], []>} : vector<32x128xbf16>, vector<128x128xbf16>, vector<32x128xf32> -> vector<32x128xf32>
    %c0_22 = arith.constant 0 : index
    %c0_23 = arith.constant 0 : index
    %40 = vector.load %arg9[%c0_22, %c0_23] : memref<1x128xf32, #tpu.memory_space<vmem>>, vector<1x128xf32>
    %41 = vector.broadcast %40 : vector<1x128xf32> to vector<32x128xf32>
    %42 = arith.addf %39, %41 : vector<32x128xf32>
    %c0_24 = arith.constant 0 : index
    %c0_25 = arith.constant 0 : index
    %43 = vector.load %arg11[%c0_24, %c0_25] : memref<32x128xf32, #tpu.memory_space<vmem>>, vector<32x128xf32>
    tpu.vector_store %arg11[%c0_24, %c0_25], %42 {strides = array<i32>} : memref<32x128xf32, #tpu.memory_space<vmem>>, vector<32x128xf32>,
    return
  }
  func.func @transform_0(%arg0: i32) -> (i32, i32) {
    %c0_i32 = arith.constant 0 : i32
    %c0_i32_0 = arith.constant 0 : i32
    return %arg0, %c0_i32 : i32, i32
  }
  func.func @transform_1(%arg0: i32) -> (i32, i32) {
    %c0_i32 = arith.constant 0 : i32
    %c0_i32_0 = arith.constant 0 : i32
    %c0_i32_1 = arith.constant 0 : i32
    return %c0_i32, %c0_i32_0 : i32, i32
  }
  func.func @transform_2(%arg0: i32) -> (i32, i32) {
    %c0_i32 = arith.constant 0 : i32
    %c0_i32_0 = arith.constant 0 : i32
    %c0_i32_1 = arith.constant 0 : i32
    return %c0_i32, %c0_i32_0 : i32, i32
  }
  func.func @transform_3(%arg0: i32) -> (i32, i32) {
    %c0_i32 = arith.constant 0 : i32
    %c0_i32_0 = arith.constant 0 : i32
    %c0_i32_1 = arith.constant 0 : i32
    return %c0_i32, %c0_i32_0 : i32, i32
  }
  func.func @transform_4(%arg0: i32) -> (i32, i32) {
    %c0_i32 = arith.constant 0 : i32
    %c0_i32_0 = arith.constant 0 : i32
    %c0_i32_1 = arith.constant 0 : i32
    return %c0_i32, %c0_i32_0 : i32, i32
  }
  func.func @transform_5(%arg0: i32) -> (i32, i32) {
    %c0_i32 = arith.constant 0 : i32
    %c0_i32_0 = arith.constant 0 : i32
    %c0_i32_1 = arith.constant 0 : i32
    return %c0_i32, %c0_i32_0 : i32, i32
  }
  func.func @transform_6(%arg0: i32) -> (i32, i32) {
    %c0_i32 = arith.constant 0 : i32
    %c0_i32_0 = arith.constant 0 : i32
    %c0_i32_1 = arith.constant 0 : i32
    return %c0_i32, %c0_i32_0 : i32, i32
  }
  func.func @transform_7(%arg0: i32) -> (i32, i32) {
    %c0_i32 = arith.constant 0 : i32
    %c0_i32_0 = arith.constant 0 : i32
    %c0_i32_1 = arith.constant 0 : i32
    return %c0_i32, %c0_i32_0 : i32, i32
  }
  func.func @transform_8(%arg0: i32) -> (i32, i32) {
    %c0_i32 = arith.constant 0 : i32
    %c0_i32_0 = arith.constant 0 : i32
    %c0_i32_1 = arith.constant 0 : i32
    return %c0_i32, %c0_i32_0 : i32, i32
  }
  func.func @transform_9(%arg0: i32) -> i32 {
    %c0_i32 = arith.constant 0 : i32
    %c0_i32_0 = arith.constant 0 : i32
    return %c0_i32 : i32
  }
  func.func @transform_10(%arg0: i32) -> (i32, i32) {
    %c0_i32 = arith.constant 0 : i32
    %c0_i32_0 = arith.constant 0 : i32
    return %arg0, %c0_i32 : i32, i32
  }
}

</mosaic_0001>

<llo_original>
// kernel: tpu_custom_call.1
$region0: #{tpu_custom_call.1}
  #allocation0 [shape = 'u32[]', space=smem, size = 0x4, offset = 0x4, fixed_abs, tag = 'smem constant byte address 0x4 - core index']
  #allocation1 [shape = 'u32[144,128]{1,0:T(1,128)}', space=vmem, size = 0x12000, scoped, tag = 'internal scratch']
  %s0 = inlined_call_operand.hbm [shape: f32[32,128], index: 0, kind: input, shape index: {}]
  %s1 = inlined_call_operand.hbm [shape: bf16[128,128], index: 1, kind: input, shape index: {}]
  %s2 = inlined_call_operand.vmem [shape: f32[1,128], index: 2, kind: input, shape index: {}]
  %s3 = inlined_call_operand.hbm [shape: bf16[128,128], index: 3, kind: input, shape index: {}]
  %s4 = inlined_call_operand.vmem [shape: f32[1,128], index: 4, kind: input, shape index: {}]
  %s5 = inlined_call_operand.hbm [shape: bf16[128,128], index: 5, kind: input, shape index: {}]
  %s6 = inlined_call_operand.vmem [shape: f32[1,128], index: 6, kind: input, shape index: {}]
  %s7 = inlined_call_operand.hbm [shape: bf16[128,128], index: 7, kind: input, shape index: {}]
  %s8 = inlined_call_operand.vmem [shape: f32[1,128], index: 8, kind: input, shape index: {}]
  %s9 = inlined_call_operand.vmem [shape: f32[3], index: 9, kind: input, shape index: {}]
  %s10 = inlined_call_operand.hbm [shape: f32[32,128], index: 10, kind: output, shape index: {}]
  %s11 = sld [smem:[#allocation0]]
  $region74: #{tpu_custom_call.1} parent=0
    _
  %s13 = ssub.s32 1, %s11
  %s14 = scalar_select 0, %s13, %s11
  $region1: #{tpu_custom_call.1} parent=0
    #allocation2 [shape = 'u8[16384]{0}', space=vmem, size = 0x4000, scoped, tag = 'input window, operand 0, single buffered']
    #allocation3 [shape = 's32[1]{0}', space=sflag, size = 0x4, scoped, tag = 'scoped memory for tpu_custom_call.1']
    #allocation4 [shape = 's32[1]{0}', space=sflag, size = 0x4, scoped, tag = 'scoped memory for tpu_custom_call.1']
    #allocation5 [shape = 's32[1]{0}', space=sflag, size = 0x4, scoped, tag = 'scoped memory for tpu_custom_call.1']
    #allocation6 [shape = 'u8[32768]{0}', space=vmem, size = 0x8000, scoped, tag = 'input window, operand 1, single buffered']
    #allocation7 [shape = 's32[1]{0}', space=sflag, size = 0x4, scoped, tag = 'scoped memory for tpu_custom_call.1']
    #allocation8 [shape = 'u8[32768]{0}', space=vmem, size = 0x8000, scoped, tag = 'input window, operand 3, single buffered']
    #allocation9 [shape = 'u8[32768]{0}', space=vmem, size = 0x8000, scoped, tag = 'input window, operand 5, single buffered']
    #allocation10 [shape = 's32[1]{0}', space=sflag, size = 0x4, scoped, tag = 'scoped memory for tpu_custom_call.1']
    #allocation11 [shape = 'u8[32768]{0}', space=vmem, size = 0x8000, scoped, tag = 'input window, operand 7, single buffered']
    #allocation12 [shape = 'u8[512]{0}', space=smem, size = 0x200, scoped, tag = 'input window, operand 9, single buffered']
    #allocation13 [shape = 'u8[16384]{0}', space=vmem, size = 0x4000, scoped, tag = 'output window, operand 0, single buffered']
    %15 = vsyncpa [#allocation3], 0
    %16 = vsyncpa [#allocation7], 0
    %17 = vsyncpa [#allocation10], 0
    %18 = vsyncpa [#allocation5], 0
    %19 = vsyncpa [#allocation4], 0
    // Predicated region
    $region2: #{tpu_custom_call.1} parent=1 // pred_check
      _
    $region3: #{tpu_custom_call.1} parent=1 // pred_check_branch
      %21 = sbr.rel (0) target = $region5
    $region4: #{tpu_custom_call.1} parent=1 // pred_region
      %s23 = ssub.s32 512, 512
      %24 = vsyncadd [#allocation3], %s23
      %s25 = sshll.u32 [#allocation2], 4
      %s26 = int_to_ptr.vmem [resolvable:$true] %s25
      %31 = dma.hbm_to_vmem [thread:$0]  %s0, 512, %s26, [#allocation3], 128, 128, 8
    $region5: #{tpu_custom_call.1} parent=1 // pred_fallthru
      _
    // Predicated region
    $region6: #{tpu_custom_call.1} parent=1 // pred_check
      _
    $region7: #{tpu_custom_call.1} parent=1 // pred_check_branch
      %33 = sbr.rel (0) target = $region9
    $region8: #{tpu_custom_call.1} parent=1 // pred_region
      %s35 = ssub.s32 1024, 1024
      %36 = vsyncadd [#allocation7], %s35
      %s37 = sshll.u32 [#allocation6], 4
      %s38 = int_to_ptr.vmem [resolvable:$true] %s37
      %43 = dma.hbm_to_vmem [thread:$0]  %s1, 1024, %s38, [#allocation7], 64, 64, 4
    $region9: #{tpu_custom_call.1} parent=1 // pred_fallthru
      _
    // Predicated region
    $region10: #{tpu_custom_call.1} parent=1 // pred_check
      _
    $region11: #{tpu_custom_call.1} parent=1 // pred_check_branch
      %45 = sbr.rel (0) target = $region13
    $region12: #{tpu_custom_call.1} parent=1 // pred_region
      _
    $region13: #{tpu_custom_call.1} parent=1 // pred_fallthru
      _
    // Predicated region
    $region14: #{tpu_custom_call.1} parent=1 // pred_check
      _
    $region15: #{tpu_custom_call.1} parent=1 // pred_check_branch
      %47 = sbr.rel (0) target = $region17
    $region16: #{tpu_custom_call.1} parent=1 // pred_region
      %s49 = ssub.s32 1024, 1024
      %50 = vsyncadd [#allocation7], %s49
      %s51 = sshll.u32 [#allocation8], 4
      %s52 = int_to_ptr.vmem [resolvable:$true] %s51
      %57 = dma.hbm_to_vmem [thread:$0]  %s3, 1024, %s52, [#allocation7], 64, 64, 4
    $region17: #{tpu_custom_call.1} parent=1 // pred_fallthru
      _
    // Predicated region
    $region18: #{tpu_custom_call.1} parent=1 // pred_check
      _
    $region19: #{tpu_custom_call.1} parent=1 // pred_check_branch
      %59 = sbr.rel (0) target = $region21
    $region20: #{tpu_custom_call.1} parent=1 // pred_region
      _
    $region21: #{tpu_custom_call.1} parent=1 // pred_fallthru
      _
    // Predicated region
    $region22: #{tpu_custom_call.1} parent=1 // pred_check
      _
    $region23: #{tpu_custom_call.1} parent=1 // pred_check_branch
      %61 = sbr.rel (0) target = $region25
    $region24: #{tpu_custom_call.1} parent=1 // pred_region
      %s63 = ssub.s32 1024, 1024
      %64 = vsyncadd [#allocation10], %s63
      %s65 = sshll.u32 [#allocation9], 4
      %s66 = int_to_ptr.vmem [resolvable:$true] %s65
      %71 = dma.hbm_to_vmem [thread:$0]  %s5, 1024, %s66, [#allocation10], 64, 64, 4
    $region25: #{tpu_custom_call.1} parent=1 // pred_fallthru
      _
    // Predicated region
    $region26: #{tpu_custom_call.1} parent=1 // pred_check
      _
    $region27: #{tpu_custom_call.1} parent=1 // pred_check_branch
      %73 = sbr.rel (0) target = $region29
    $region28: #{tpu_custom_call.1} parent=1 // pred_region
      _
    $region29: #{tpu_custom_call.1} parent=1 // pred_fallthru
      _
    // Predicated region
    $region30: #{tpu_custom_call.1} parent=1 // pred_check
      _
    $region31: #{tpu_custom_call.1} parent=1 // pred_check_branch
      %75 = sbr.rel (0) target = $region33
    $region32: #{tpu_custom_call.1} parent=1 // pred_region
      %s77 = ssub.s32 1024, 1024
      %78 = vsyncadd [#allocation10], %s77
      %s79 = sshll.u32 [#allocation11], 4
      %s80 = int_to_ptr.vmem [resolvable:$true] %s79
      %85 = dma.hbm_to_vmem [thread:$0]  %s7, 1024, %s80, [#allocation10], 64, 64, 4
    $region33: #{tpu_custom_call.1} parent=1 // pred_fallthru
      _
    // Predicated region
    $region34: #{tpu_custom_call.1} parent=1 // pred_check
      _
    $region35: #{tpu_custom_call.1} parent=1 // pred_check_branch
      %87 = sbr.rel (0) target = $region37
    $region36: #{tpu_custom_call.1} parent=1 // pred_region
      _
    $region37: #{tpu_custom_call.1} parent=1 // pred_fallthru
      _
    // Predicated region
    $region38: #{tpu_custom_call.1} parent=1 // pred_check
      _
    $region39: #{tpu_custom_call.1} parent=1 // pred_check_branch
      %89 = sbr.rel (0) target = $region41
    $region40: #{tpu_custom_call.1} parent=1 // pred_region
      %s91 = ssub.s32 16, 16
      %92 = vsyncadd [#allocation5], %s91
      %s94 = sshll.u32 %s9, 4
      %s95 = int_to_ptr.vmem [resolvable:$true] %s94
      %97 = dma.vmem_to_smem %s95, 16, [#allocation12], [#allocation5]
    $region41: #{tpu_custom_call.1} parent=1 // pred_fallthru
      _
    // Predicated region
    $region42: #{tpu_custom_call.1} parent=1 // pred_check
      _
    $region43: #{tpu_custom_call.1} parent=1 // pred_check_branch
      %99 = sbr.rel (0) target = $region45
    $region44: #{tpu_custom_call.1} parent=1 // pred_region
      %100 = dma.done [#allocation3], 512
    $region45: #{tpu_custom_call.1} parent=1 // pred_fallthru
      _
    // Predicated region
    $region46: #{tpu_custom_call.1} parent=1 // pred_check
      _
    $region47: #{tpu_custom_call.1} parent=1 // pred_check_branch
      %102 = sbr.rel (0) target = $region49
    $region48: #{tpu_custom_call.1} parent=1 // pred_region
      %103 = dma.done [#allocation7], 1024
    $region49: #{tpu_custom_call.1} parent=1 // pred_fallthru
      _
    // Predicated region
    $region50: #{tpu_custom_call.1} parent=1 // pred_check
      _
    $region51: #{tpu_custom_call.1} parent=1 // pred_check_branch
      %105 = sbr.rel (0) target = $region53
    $region52: #{tpu_custom_call.1} parent=1 // pred_region
      %106 = dma.done [#allocation7], 1024
    $region53: #{tpu_custom_call.1} parent=1 // pred_fallthru
      _
    // Predicated region
    $region54: #{tpu_custom_call.1} parent=1 // pred_check
      _
    $region55: #{tpu_custom_call.1} parent=1 // pred_check_branch
      %108 = sbr.rel (0) target = $region57
    $region56: #{tpu_custom_call.1} parent=1 // pred_region
      %109 = dma.done [#allocation10], 1024
    $region57: #{tpu_custom_call.1} parent=1 // pred_fallthru
      _
    // Predicated region
    $region58: #{tpu_custom_call.1} parent=1 // pred_check
      _
    $region59: #{tpu_custom_call.1} parent=1 // pred_check_branch
      %111 = sbr.rel (0) target = $region61
    $region60: #{tpu_custom_call.1} parent=1 // pred_region
      %112 = dma.done [#allocation10], 1024
    $region61: #{tpu_custom_call.1} parent=1 // pred_fallthru
      _
    // Predicated region
    $region62: #{tpu_custom_call.1} parent=1 // pred_check
      _
    $region63: #{tpu_custom_call.1} parent=1 // pred_check_branch
      %114 = sbr.rel (0) target = $region65
    $region64: #{tpu_custom_call.1} parent=1 // pred_region
      %115 = dma.done [#allocation5], 16
    $region65: #{tpu_custom_call.1} parent=1 // pred_fallthru
      _
    %116 = sfence
    %s118 = sld [smem:[#allocation12]]
    %s119 = sld [smem:[#allocation12 + $0x1]]
    %s120 = sld [smem:[#allocation12 + $0x2]]
    %v121 = vld [vmem:[#allocation2] sm:$0xff]
    %v122 = vld [vmem:[#allocation2 + $0x8] sm:$0xff]
    %v123 = vld [vmem:[#allocation2 + $0x10] sm:$0xff]
    %v124 = vld [vmem:[#allocation2 + $0x18] sm:$0xff]
    %v125 = vpack.c.bf16 %v122, %v121
    %v126 = vpack.c.bf16 %v124, %v123
    %v127 = vld [vmem:[#allocation6] sm:$0xf]
    %v128 = vld [vmem:[#allocation6 + $0x4] sm:$0xf]
    %v129 = vld [vmem:[#allocation6 + $0x8] sm:$0xf]
    %v130 = vld [vmem:[#allocation6 + $0xc] sm:$0xf]
    %v131 = vld [vmem:[#allocation6 + $0x10] sm:$0xf]
    %v132 = vld [vmem:[#allocation6 + $0x14] sm:$0xf]
    %v133 = vld [vmem:[#allocation6 + $0x18] sm:$0xf]
    %v134 = vld [vmem:[#allocation6 + $0x1c] sm:$0xf]
    %v135 = vld [vmem:[#allocation6 + $0x20] sm:$0xf]
    %v136 = vld [vmem:[#allocation6 + $0x24] sm:$0xf]
    %v137 = vld [vmem:[#allocation6 + $0x28] sm:$0xf]
    %v138 = vld [vmem:[#allocation6 + $0x2c] sm:$0xf]
    %v139 = vld [vmem:[#allocation6 + $0x30] sm:$0xf]
    %v140 = vld [vmem:[#allocation6 + $0x34] sm:$0xf]
    %v141 = vld [vmem:[#allocation6 + $0x38] sm:$0xf]
    %v142 = vld [vmem:[#allocation6 + $0x3c] sm:$0xf]
    %v143 = vld [vmem:[%s2] sm:$0x1]
    %v145 = vlaneseq
    %v146 = vshrl.u32 %v145, 7
    %v147 = vsub.s32 0, %v146
    %v148 = vrot.slane %v143, %v147
    %v166 = vunpack.c.l.b16 %v127
    %v167 = vunpack.c.l.b16 %v128
    %v168 = vunpack.c.l.b16 %v129
    %v169 = vunpack.c.l.b16 %v130
    %v170 = vunpack.c.l.b16 %v131
    %v171 = vunpack.c.l.b16 %v132
    %v172 = vunpack.c.l.b16 %v133
    %v173 = vunpack.c.l.b16 %v134
    %v174 = vunpack.c.l.b16 %v135
    %v175 = vunpack.c.l.b16 %v136
    %v176 = vunpack.c.l.b16 %v137
    %v177 = vunpack.c.l.b16 %v138
    %v178 = vunpack.c.l.b16 %v139
    %v179 = vunpack.c.l.b16 %v140
    %v180 = vunpack.c.l.b16 %v141
    %v181 = vunpack.c.l.b16 %v142
    %v182 = vpack.c.b16 %v167, %v166
    %v183 = vpack.c.b16 %v169, %v168
    %v184 = vpack.c.b16 %v171, %v170
    %v185 = vpack.c.b16 %v173, %v172
    %v186 = vpack.c.b16 %v175, %v174
    %v187 = vpack.c.b16 %v177, %v176
    %v188 = vpack.c.b16 %v179, %v178
    %v189 = vpack.c.b16 %v181, %v180
    %198 = vmatprep.subr.bf16.mxu0 0
    %199 = vmatpush1.bf16.msra.mxu0 %v182
    %200 = vmatprep.subr.bf16.mxu0 0
    %201 = vmatpush1.bf16.msra.mxu0 %v183
    %202 = vmatprep.subr.bf16.mxu0 0
    %203 = vmatpush1.bf16.msra.mxu0 %v184
    %204 = vmatprep.subr.bf16.mxu0 0
    %205 = vmatpush1.bf16.msra.mxu0 %v185
    %206 = vmatprep.subr.bf16.mxu0 0
    %207 = vmatpush1.bf16.msra.mxu0 %v186
    %208 = vmatprep.subr.bf16.mxu0 0
    %209 = vmatpush1.bf16.msra.mxu0 %v187
    %210 = vmatprep.subr.bf16.mxu0 0
    %211 = vmatpush1.bf16.msra.mxu0 %v188
    %212 = vmatprep.subr.bf16.mxu0 0
    %213 = vmatpush1.bf16.msra.mxu0 %v189
    %214 = vmatprep.subr.bf16.mxu0 0
    %215 = vmatpush1.bf16.msra.mxu0 0
    %216 = vmatprep.subr.bf16.mxu0 0
    %217 = vmatpush1.bf16.msra.mxu0 0
    %218 = vmatprep.subr.bf16.mxu0 0
    %219 = vmatpush1.bf16.msra.mxu0 0
    %220 = vmatprep.subr.bf16.mxu0 0
    %221 = vmatpush1.bf16.msra.mxu0 0
    %222 = vmatprep.subr.bf16.mxu0 0
    %223 = vmatpush1.bf16.msra.mxu0 0
    %224 = vmatprep.subr.bf16.mxu0 0
    %225 = vmatpush1.bf16.msra.mxu0 0
    %226 = vmatprep.subr.bf16.mxu0 0
    %227 = vmatpush1.bf16.msra.mxu0 0
    %228 = vmatprep.subr.bf16.mxu0 0
    %229 = vmatpush1.bf16.msra.mxu0 0
    %230 = vmatprep.mubr.bf16.mxu0 0
    %231 = vmatmul.mubr.bf16.gmra.mrb[0].mxu0 %v125
    %v232 = vpop.f32.mrb[0].mxu0
    %v233 = vadd.f32 %v148, %v232
    %v234 = vpop.f32.mrb[0].mxu0
    %v235 = vpop.f32.mrb[0].mxu0
    %v236 = vadd.f32 %v148, %v235
    %v237 = vpop.f32.mrb[0].mxu0
    %238 = vmatprep.mubr.bf16.mxu0 0
    %239 = vmatmul.mubr.bf16.gmra.mrb[0].mxu0 %v126
    %v240 = vpop.f32.mrb[0].mxu0
    %v241 = vadd.f32 %v148, %v240
    %v242 = vpop.f32.mrb[0].mxu0
    %v243 = vpop.f32.mrb[0].mxu0
    %v244 = vadd.f32 %v148, %v243
    %v245 = vpop.f32.mrb[0].mxu0
    %246 = vdwg.mxu0
    %vm247 = vcmp.gt.f32.partialorder %v233, 0.0
    %vm248 = vcmp.gt.f32.partialorder %v236, 0.0
    %vm249 = vcmp.gt.f32.partialorder %v241, 0.0
    %vm250 = vcmp.gt.f32.partialorder %v244, 0.0
    %v251 = vstv %s118
    %v252 = vmul.f32 %v251, %v233
    %v253 = vmul.f32 %v251, %v236
    %v254 = vmul.f32 %v251, %v241
    %v255 = vmul.f32 %v251, %v244
    %v256 = vsel %vm247, %v233, %v252
    %v257 = vsel %vm248, %v236, %v253
    %v258 = vsel %vm249, %v241, %v254
    %v259 = vsel %vm250, %v244, %v255
    %v260 = vpack.c.bf16 %v257, %v256
    %v261 = vpack.c.bf16 %v259, %v258
    %v262 = vld [vmem:[#allocation8] sm:$0xf]
    %v263 = vld [vmem:[#allocation8 + $0x4] sm:$0xf]
    %v264 = vld [vmem:[#allocation8 + $0x8] sm:$0xf]
    %v265 = vld [vmem:[#allocation8 + $0xc] sm:$0xf]
    %v266 = vld [vmem:[#allocation8 + $0x10] sm:$0xf]
    %v267 = vld [vmem:[#allocation8 + $0x14] sm:$0xf]
    %v268 = vld [vmem:[#allocation8 + $0x18] sm:$0xf]
    %v269 = vld [vmem:[#allocation8 + $0x1c] sm:$0xf]
    %v270 = vld [vmem:[#allocation8 + $0x20] sm:$0xf]
    %v271 = vld [vmem:[#allocation8 + $0x24] sm:$0xf]
    %v272 = vld [vmem:[#allocation8 + $0x28] sm:$0xf]
    %v273 = vld [vmem:[#allocation8 + $0x2c] sm:$0xf]
    %v274 = vld [vmem:[#allocation8 + $0x30] sm:$0xf]
    %v275 = vld [vmem:[#allocation8 + $0x34] sm:$0xf]
    %v276 = vld [vmem:[#allocation8 + $0x38] sm:$0xf]
    %v277 = vld [vmem:[#allocation8 + $0x3c] sm:$0xf]
    %v278 = vld [vmem:[%s4] sm:$0x1]
    %v280 = vlaneseq
    %v281 = vshrl.u32 %v280, 7
    %v282 = vsub.s32 0, %v281
    %v283 = vrot.slane %v278, %v282
    %v301 = vunpack.c.l.b16 %v262
    %v302 = vunpack.c.l.b16 %v263
    %v303 = vunpack.c.l.b16 %v264
    %v304 = vunpack.c.l.b16 %v265
    %v305 = vunpack.c.l.b16 %v266
    %v306 = vunpack.c.l.b16 %v267
    %v307 = vunpack.c.l.b16 %v268
    %v308 = vunpack.c.l.b16 %v269
    %v309 = vunpack.c.l.b16 %v270
    %v310 = vunpack.c.l.b16 %v271
    %v311 = vunpack.c.l.b16 %v272
    %v312 = vunpack.c.l.b16 %v273
    %v313 = vunpack.c.l.b16 %v274
    %v314 = vunpack.c.l.b16 %v275
    %v315 = vunpack.c.l.b16 %v276
    %v316 = vunpack.c.l.b16 %v277
    %v317 = vpack.c.b16 %v302, %v301
    %v318 = vpack.c.b16 %v304, %v303
    %v319 = vpack.c.b16 %v306, %v305
    %v320 = vpack.c.b16 %v308, %v307
    %v321 = vpack.c.b16 %v310, %v309
    %v322 = vpack.c.b16 %v312, %v311
    %v323 = vpack.c.b16 %v314, %v313
    %v324 = vpack.c.b16 %v316, %v315
    %333 = vmatprep.subr.bf16.mxu0 0
    %334 = vmatpush1.bf16.msra.mxu0 %v317
    %335 = vmatprep.subr.bf16.mxu0 0
    %336 = vmatpush1.bf16.msra.mxu0 %v318
    %337 = vmatprep.subr.bf16.mxu0 0
    %338 = vmatpush1.bf16.msra.mxu0 %v319
    %339 = vmatprep.subr.bf16.mxu0 0
    %340 = vmatpush1.bf16.msra.mxu0 %v320
    %341 = vmatprep.subr.bf16.mxu0 0
    %342 = vmatpush1.bf16.msra.mxu0 %v321
    %343 = vmatprep.subr.bf16.mxu0 0
    %344 = vmatpush1.bf16.msra.mxu0 %v322
    %345 = vmatprep.subr.bf16.mxu0 0
    %346 = vmatpush1.bf16.msra.mxu0 %v323
    %347 = vmatprep.subr.bf16.mxu0 0
    %348 = vmatpush1.bf16.msra.mxu0 %v324
    %349 = vmatprep.subr.bf16.mxu0 0
    %350 = vmatpush1.bf16.msra.mxu0 0
    %351 = vmatprep.subr.bf16.mxu0 0
    %352 = vmatpush1.bf16.msra.mxu0 0
    %353 = vmatprep.subr.bf16.mxu0 0
    %354 = vmatpush1.bf16.msra.mxu0 0
    %355 = vmatprep.subr.bf16.mxu0 0
    %356 = vmatpush1.bf16.msra.mxu0 0
    %357 = vmatprep.subr.bf16.mxu0 0
    %358 = vmatpush1.bf16.msra.mxu0 0
    %359 = vmatprep.subr.bf16.mxu0 0
    %360 = vmatpush1.bf16.msra.mxu0 0
    %361 = vmatprep.subr.bf16.mxu0 0
    %362 = vmatpush1.bf16.msra.mxu0 0
    %363 = vmatprep.subr.bf16.mxu0 0
    %364 = vmatpush1.bf16.msra.mxu0 0
    %365 = vmatprep.mubr.bf16.mxu0 0
    %366 = vmatmul.mubr.bf16.gmra.mrb[0].mxu0 %v260
    %v367 = vpop.f32.mrb[0].mxu0
    %v368 = vadd.f32 %v283, %v367
    %v369 = vpop.f32.mrb[0].mxu0
    %v370 = vpop.f32.mrb[0].mxu0
    %v371 = vadd.f32 %v283, %v370
    %v372 = vpop.f32.mrb[0].mxu0
    %373 = vmatprep.mubr.bf16.mxu0 0
    %374 = vmatmul.mubr.bf16.gmra.mrb[0].mxu0 %v261
    %v375 = vpop.f32.mrb[0].mxu0
    %v376 = vadd.f32 %v283, %v375
    %v377 = vpop.f32.mrb[0].mxu0
    %v378 = vpop.f32.mrb[0].mxu0
    %v379 = vadd.f32 %v283, %v378
    %v380 = vpop.f32.mrb[0].mxu0
    %381 = vdwg.mxu0
    %vm382 = vcmp.gt.f32.partialorder %v368, 0.0
    %vm383 = vcmp.gt.f32.partialorder %v371, 0.0
    %vm384 = vcmp.gt.f32.partialorder %v376, 0.0
    %vm385 = vcmp.gt.f32.partialorder %v379, 0.0
    %v386 = vstv %s119
    %v387 = vmul.f32 %v386, %v368
    %v388 = vmul.f32 %v386, %v371
    %v389 = vmul.f32 %v386, %v376
    %v390 = vmul.f32 %v386, %v379
    %v391 = vsel %vm382, %v368, %v387
    %v392 = vsel %vm383, %v371, %v388
    %v393 = vsel %vm384, %v376, %v389
    %v394 = vsel %vm385, %v379, %v390
    %v395 = vpack.c.bf16 %v392, %v391
    %v396 = vpack.c.bf16 %v394, %v393
    %v397 = vld [vmem:[#allocation9] sm:$0xf]
    %v398 = vld [vmem:[#allocation9 + $0x4] sm:$0xf]
    %v399 = vld [vmem:[#allocation9 + $0x8] sm:$0xf]
    %v400 = vld [vmem:[#allocation9 + $0xc] sm:$0xf]
    %v401 = vld [vmem:[#allocation9 + $0x10] sm:$0xf]
    %v402 = vld [vmem:[#allocation9 + $0x14] sm:$0xf]
    %v403 = vld [vmem:[#allocation9 + $0x18] sm:$0xf]
    %v404 = vld [vmem:[#allocation9 + $0x1c] sm:$0xf]
    %v405 = vld [vmem:[#allocation9 + $0x20] sm:$0xf]
    %v406 = vld [vmem:[#allocation9 + $0x24] sm:$0xf]
    %v407 = vld [vmem:[#allocation9 + $0x28] sm:$0xf]
    %v408 = vld [vmem:[#allocation9 + $0x2c] sm:$0xf]
    %v409 = vld [vmem:[#allocation9 + $0x30] sm:$0xf]
    %v410 = vld [vmem:[#allocation9 + $0x34] sm:$0xf]
    %v411 = vld [vmem:[#allocation9 + $0x38] sm:$0xf]
    %v412 = vld [vmem:[#allocation9 + $0x3c] sm:$0xf]
    %v413 = vld [vmem:[%s6] sm:$0x1]
    %v415 = vlaneseq
    %v416 = vshrl.u32 %v415, 7
    %v417 = vsub.s32 0, %v416
    %v418 = vrot.slane %v413, %v417
    %v436 = vunpack.c.l.b16 %v397
    %v437 = vunpack.c.l.b16 %v398
    %v438 = vunpack.c.l.b16 %v399
    %v439 = vunpack.c.l.b16 %v400
    %v440 = vunpack.c.l.b16 %v401
    %v441 = vunpack.c.l.b16 %v402
    %v442 = vunpack.c.l.b16 %v403
    %v443 = vunpack.c.l.b16 %v404
    %v444 = vunpack.c.l.b16 %v405
    %v445 = vunpack.c.l.b16 %v406
    %v446 = vunpack.c.l.b16 %v407
    %v447 = vunpack.c.l.b16 %v408
    %v448 = vunpack.c.l.b16 %v409
    %v449 = vunpack.c.l.b16 %v410
    %v450 = vunpack.c.l.b16 %v411
    %v451 = vunpack.c.l.b16 %v412
    %v452 = vpack.c.b16 %v437, %v436
    %v453 = vpack.c.b16 %v439, %v438
    %v454 = vpack.c.b16 %v441, %v440
    %v455 = vpack.c.b16 %v443, %v442
    %v456 = vpack.c.b16 %v445, %v444
    %v457 = vpack.c.b16 %v447, %v446
    %v458 = vpack.c.b16 %v449, %v448
    %v459 = vpack.c.b16 %v451, %v450
    %468 = vmatprep.subr.bf16.mxu0 0
    %469 = vmatpush1.bf16.msra.mxu0 %v452
    %470 = vmatprep.subr.bf16.mxu0 0
    %471 = vmatpush1.bf16.msra.mxu0 %v453
    %472 = vmatprep.subr.bf16.mxu0 0
    %473 = vmatpush1.bf16.msra.mxu0 %v454
    %474 = vmatprep.subr.bf16.mxu0 0
    %475 = vmatpush1.bf16.msra.mxu0 %v455
    %476 = vmatprep.subr.bf16.mxu0 0
    %477 = vmatpush1.bf16.msra.mxu0 %v456
    %478 = vmatprep.subr.bf16.mxu0 0
    %479 = vmatpush1.bf16.msra.mxu0 %v457
    %480 = vmatprep.subr.bf16.mxu0 0
    %481 = vmatpush1.bf16.msra.mxu0 %v458
    %482 = vmatprep.subr.bf16.mxu0 0
    %483 = vmatpush1.bf16.msra.mxu0 %v459
    %484 = vmatprep.subr.bf16.mxu0 0
    %485 = vmatpush1.bf16.msra.mxu0 0
    %486 = vmatprep.subr.bf16.mxu0 0
    %487 = vmatpush1.bf16.msra.mxu0 0
    %488 = vmatprep.subr.bf16.mxu0 0
    %489 = vmatpush1.bf16.msra.mxu0 0
    %490 = vmatprep.subr.bf16.mxu0 0
    %491 = vmatpush1.bf16.msra.mxu0 0
    %492 = vmatprep.subr.bf16.mxu0 0
    %493 = vmatpush1.bf16.msra.mxu0 0
    %494 = vmatprep.subr.bf16.mxu0 0
    %495 = vmatpush1.bf16.msra.mxu0 0
    %496 = vmatprep.subr.bf16.mxu0 0
    %497 = vmatpush1.bf16.msra.mxu0 0
    %498 = vmatprep.subr.bf16.mxu0 0
    %499 = vmatpush1.bf16.msra.mxu0 0
    %500 = vmatprep.mubr.bf16.mxu0 0
    %501 = vmatmul.mubr.bf16.gmra.mrb[0].mxu0 %v395
    %v502 = vpop.f32.mrb[0].mxu0
    %v503 = vadd.f32 %v418, %v502
    %v504 = vpop.f32.mrb[0].mxu0
    %v505 = vpop.f32.mrb[0].mxu0
    %v506 = vadd.f32 %v418, %v505
    %v507 = vpop.f32.mrb[0].mxu0
    %508 = vmatprep.mubr.bf16.mxu0 0
    %509 = vmatmul.mubr.bf16.gmra.mrb[0].mxu0 %v396
    %v510 = vpop.f32.mrb[0].mxu0
    %v511 = vadd.f32 %v418, %v510
    %v512 = vpop.f32.mrb[0].mxu0
    %v513 = vpop.f32.mrb[0].mxu0
    %v514 = vadd.f32 %v418, %v513
    %v515 = vpop.f32.mrb[0].mxu0
    %516 = vdwg.mxu0
    %vm517 = vcmp.gt.f32.partialorder %v503, 0.0
    %vm518 = vcmp.gt.f32.partialorder %v506, 0.0
    %vm519 = vcmp.gt.f32.partialorder %v511, 0.0
    %vm520 = vcmp.gt.f32.partialorder %v514, 0.0
    %v521 = vstv %s120
    %v522 = vmul.f32 %v521, %v503
    %v523 = vmul.f32 %v521, %v506
    %v524 = vmul.f32 %v521, %v511
    %v525 = vmul.f32 %v521, %v514
    %v526 = vsel %vm517, %v503, %v522
    %v527 = vsel %vm518, %v506, %v523
    %v528 = vsel %vm519, %v511, %v524
    %v529 = vsel %vm520, %v514, %v525
    %v530 = vpack.c.bf16 %v527, %v526
    %v531 = vpack.c.bf16 %v529, %v528
    %v532 = vld [vmem:[#allocation11] sm:$0xf]
    %v533 = vld [vmem:[#allocation11 + $0x4] sm:$0xf]
    %v534 = vld [vmem:[#allocation11 + $0x8] sm:$0xf]
    %v535 = vld [vmem:[#allocation11 + $0xc] sm:$0xf]
    %v536 = vld [vmem:[#allocation11 + $0x10] sm:$0xf]
    %v537 = vld [vmem:[#allocation11 + $0x14] sm:$0xf]
    %v538 = vld [vmem:[#allocation11 + $0x18] sm:$0xf]
    %v539 = vld [vmem:[#allocation11 + $0x1c] sm:$0xf]
    %v540 = vld [vmem:[#allocation11 + $0x20] sm:$0xf]
    %v541 = vld [vmem:[#allocation11 + $0x24] sm:$0xf]
    %v542 = vld [vmem:[#allocation11 + $0x28] sm:$0xf]
    %v543 = vld [vmem:[#allocation11 + $0x2c] sm:$0xf]
    %v544 = vld [vmem:[#allocation11 + $0x30] sm:$0xf]
    %v545 = vld [vmem:[#allocation11 + $0x34] sm:$0xf]
    %v546 = vld [vmem:[#allocation11 + $0x38] sm:$0xf]
    %v547 = vld [vmem:[#allocation11 + $0x3c] sm:$0xf]
    %v548 = vld [vmem:[%s8] sm:$0x1]
    %v550 = vlaneseq
    %v551 = vshrl.u32 %v550, 7
    %v552 = vsub.s32 0, %v551
    %v553 = vrot.slane %v548, %v552
    %v571 = vunpack.c.l.b16 %v532
    %v572 = vunpack.c.l.b16 %v533
    %v573 = vunpack.c.l.b16 %v534
    %v574 = vunpack.c.l.b16 %v535
    %v575 = vunpack.c.l.b16 %v536
    %v576 = vunpack.c.l.b16 %v537
    %v577 = vunpack.c.l.b16 %v538
    %v578 = vunpack.c.l.b16 %v539
    %v579 = vunpack.c.l.b16 %v540
    %v580 = vunpack.c.l.b16 %v541
    %v581 = vunpack.c.l.b16 %v542
    %v582 = vunpack.c.l.b16 %v543
    %v583 = vunpack.c.l.b16 %v544
    %v584 = vunpack.c.l.b16 %v545
    %v585 = vunpack.c.l.b16 %v546
    %v586 = vunpack.c.l.b16 %v547
    %v587 = vpack.c.b16 %v572, %v571
    %v588 = vpack.c.b16 %v574, %v573
    %v589 = vpack.c.b16 %v576, %v575
    %v590 = vpack.c.b16 %v578, %v577
    %v591 = vpack.c.b16 %v580, %v579
    %v592 = vpack.c.b16 %v582, %v581
    %v593 = vpack.c.b16 %v584, %v583
    %v594 = vpack.c.b16 %v586, %v585
    %603 = vmatprep.subr.bf16.mxu0 0
    %604 = vmatpush1.bf16.msra.mxu0 %v587
    %605 = vmatprep.subr.bf16.mxu0 0
    %606 = vmatpush1.bf16.msra.mxu0 %v588
    %607 = vmatprep.subr.bf16.mxu0 0
    %608 = vmatpush1.bf16.msra.mxu0 %v589
    %609 = vmatprep.subr.bf16.mxu0 0
    %610 = vmatpush1.bf16.msra.mxu0 %v590
    %611 = vmatprep.subr.bf16.mxu0 0
    %612 = vmatpush1.bf16.msra.mxu0 %v591
    %613 = vmatprep.subr.bf16.mxu0 0
    %614 = vmatpush1.bf16.msra.mxu0 %v592
    %615 = vmatprep.subr.bf16.mxu0 0
    %616 = vmatpush1.bf16.msra.mxu0 %v593
    %617 = vmatprep.subr.bf16.mxu0 0
    %618 = vmatpush1.bf16.msra.mxu0 %v594
    %619 = vmatprep.subr.bf16.mxu0 0
    %620 = vmatpush1.bf16.msra.mxu0 0
    %621 = vmatprep.subr.bf16.mxu0 0
    %622 = vmatpush1.bf16.msra.mxu0 0
    %623 = vmatprep.subr.bf16.mxu0 0
    %624 = vmatpush1.bf16.msra.mxu0 0
    %625 = vmatprep.subr.bf16.mxu0 0
    %626 = vmatpush1.bf16.msra.mxu0 0
    %627 = vmatprep.subr.bf16.mxu0 0
    %628 = vmatpush1.bf16.msra.mxu0 0
    %629 = vmatprep.subr.bf16.mxu0 0
    %630 = vmatpush1.bf16.msra.mxu0 0
    %631 = vmatprep.subr.bf16.mxu0 0
    %632 = vmatpush1.bf16.msra.mxu0 0
    %633 = vmatprep.subr.bf16.mxu0 0
    %634 = vmatpush1.bf16.msra.mxu0 0
    %635 = vmatprep.mubr.bf16.mxu0 0
    %636 = vmatmul.mubr.bf16.gmra.mrb[0].mxu0 %v530
    %v637 = vpop.f32.mrb[0].mxu0
    %v638 = vadd.f32 %v553, %v637
    %v639 = vpop.f32.mrb[0].mxu0
    %v640 = vpop.f32.mrb[0].mxu0
    %v641 = vadd.f32 %v553, %v640
    %v642 = vpop.f32.mrb[0].mxu0
    %643 = vmatprep.mubr.bf16.mxu0 0
    %644 = vmatmul.mubr.bf16.gmra.mrb[0].mxu0 %v531
    %v645 = vpop.f32.mrb[0].mxu0
    %v646 = vadd.f32 %v553, %v645
    %v647 = vpop.f32.mrb[0].mxu0
    %v648 = vpop.f32.mrb[0].mxu0
    %v649 = vadd.f32 %v553, %v648
    %v650 = vpop.f32.mrb[0].mxu0
    %651 = vdwg.mxu0
    %652 = vst [vmem:[#allocation13] sm:$0xff] %v638
    %653 = vst [vmem:[#allocation13 + $0x8] sm:$0xff] %v641
    %654 = vst [vmem:[#allocation13 + $0x10] sm:$0xff] %v646
    %655 = vst [vmem:[#allocation13 + $0x18] sm:$0xff] %v649
    // Predicated region
    $region66: #{tpu_custom_call.1} parent=1 // pred_check
      _
    $region67: #{tpu_custom_call.1} parent=1 // pred_check_branch
      %657 = sbr.rel (0) target = $region69
    $region68: #{tpu_custom_call.1} parent=1 // pred_region
      %s659 = ssub.s32 512, 512
      %660 = vsyncadd [#allocation4], %s659
      %s661 = sshll.u32 [#allocation13], 4
      %s662 = int_to_ptr.vmem [resolvable:$true] %s661
      %667 = dma.vmem_to_hbm [thread:$0]  %s662, 512, %s10, [#allocation4], 128, 128, 8
    $region69: #{tpu_custom_call.1} parent=1 // pred_fallthru
      _
    // Predicated region
    $region70: #{tpu_custom_call.1} parent=1 // pred_check
      _
    $region71: #{tpu_custom_call.1} parent=1 // pred_check_branch
      %669 = sbr.rel (0) target = $region73
    $region72: #{tpu_custom_call.1} parent=1 // pred_region
      %670 = dma.done [#allocation4], 512
    $region73: #{tpu_custom_call.1} parent=1 // pred_fallthru
      _
    %671 = vsyncpa [#allocation3], 1
    %672 = vsyncpa [#allocation7], 1
    %673 = vsyncpa [#allocation10], 1
    %674 = vsyncpa [#allocation4], 1
    %675 = vsyncpa [#allocation5], 1

</llo_original>
